<compile_context>
chip_gen: v6e
topology: v6e:2x2x1
jax: 0.10.0
libtpu: 0.0.40
codegen_flags: <defaults>
</compile_context>

<pallas_src>
import jax
import jax.numpy as jnp
from jax.experimental import pallas as pl
from jax.experimental.pallas import tpu as pltpu


def _round_up(v, m):
    return ((v + m - 1) // m) * m


def _linear_relu_kernel(x_ref, w_ref, b_ref, o_ref):
    """One (tm, n_pad) output tile in a single shot.

    x_ref: (tm, k_pad)     bf16  activation tile (streams over the M grid axis)
    w_ref: (k_pad, n_pad)  bf16  pre-transposed weight, VMEM-resident (const index_map)
    b_ref: (1, n_pad)      f32   bias, VMEM-resident
    o_ref: (tm, n_pad)     bf16  output tile (lane-dense, unmasked stores)
    """
    acc = jnp.dot(x_ref[...], w_ref[...], preferred_element_type=jnp.float32)
    # Fused bias + ReLU in f32 on the VPU, single cast to the output dtype.
    o_ref[...] = jnp.maximum(acc + b_ref[...], 0.0).astype(o_ref.dtype)


def make_linear_relu(weight, bias, compute_dtype=jnp.bfloat16, out_dtype=jnp.float32):
    """Build a jitted y = relu(x @ W.T + b).

    weight: (out_dim, in_dim)  -- PyTorch nn.Linear layout
    bias:   (out_dim,)
    All parameter padding / transpose / casting happens ONCE here.
    """
    out_dim, in_dim = weight.shape

    # ---- one-time parameter prep (out of the per-call path) ---------------
    n_pad = _round_up(out_dim, 128)     # lane-dense output -> unmasked vst
    k_pad = _round_up(in_dim, 128)

    # Pre-transpose once to (K, N): canonical MXU feed on v5e/v6e/v7x.
    w_p = jnp.zeros((k_pad, n_pad), compute_dtype)
    w_p = w_p.at[:in_dim, :out_dim].set(weight.T.astype(compute_dtype))
    b_p = jnp.zeros((1, n_pad), jnp.float32)
    b_p = b_p.at[0, :out_dim].set(bias.astype(jnp.float32))

    @jax.jit
    def fwd(x):
        m, kx = x.shape
        assert kx == in_dim, "input feature dim mismatch"

        # ---- M tiling: big tiles for throughput, >=2 tiles for v7x megacore
        #      when the batch is large enough, single tile (grid=(1,)) when tiny.
        m_pad = _round_up(m, 8)
        if m_pad > 512:
            tm = 512                              # mem-bound sweet spot
        elif m_pad >= 256:
            tm = _round_up(m_pad // 2, 8)         # two tiles -> both v7x TCs busy
        else:
            tm = m_pad                            # tiny batch: one-shot, grid=(1,)
        m_pad = _round_up(m_pad, tm)

        if m_pad == m and k_pad == in_dim:
            x_p = x.astype(compute_dtype)
        else:
            x_p = jnp.zeros((m_pad, k_pad), compute_dtype)
            x_p = x_p.at[:m, :in_dim].set(x.astype(compute_dtype))

        grid = (m_pad // tm,)

        # VMEM sized from actual buffers: 2x x tile + resident W + bias + 2x out tile.
        itm = jnp.dtype(compute_dtype).itemsize
        vmem_bytes = (2 * tm * k_pad * itm        # double-buffered x
                      + k_pad * n_pad * itm       # resident weight
                      + 2 * 1 * n_pad * 4         # bias (f32)
                      + 2 * tm * n_pad * itm)     # double-buffered output
        vmem_limit = min(max(2 * vmem_bytes, 2 * 1024 * 1024), 16 * 1024 * 1024)

        cost = pl.CostEstimate(
            flops=2 * m_pad * n_pad * k_pad,
            transcendentals=0,
            bytes_accessed=(x_p.size * itm
                            + w_p.size * itm
                            + b_p.size * 4
                            + m_pad * n_pad * itm))

        y_pad = pl.pallas_call(
            _linear_relu_kernel,
            out_shape=jax.ShapeDtypeStruct((m_pad, n_pad), compute_dtype),
            grid_spec=pltpu.PrefetchScalarGridSpec(
                num_scalar_prefetch=0,
                grid=grid,
                in_specs=[
                    pl.BlockSpec((tm, k_pad), lambda i: (i, 0)),      # x streams over M
                    pl.BlockSpec((k_pad, n_pad), lambda i: (0, 0)),   # W: VMEM-resident
                    pl.BlockSpec((1, n_pad), lambda i: (0, 0)),       # bias: resident
                ],
                out_specs=pl.BlockSpec((tm, n_pad), lambda i: (i, 0)),
            ),
            compiler_params=pltpu.CompilerParams(
                dimension_semantics=("parallel",),
                vmem_limit_bytes=vmem_limit),
            cost_estimate=cost,
        )(x_p, w_p, b_p)

        # Slice off padding; cast the tiny (m, out_dim) result to the module dtype.
        return y_pad[:m, :out_dim].astype(out_dtype)

    return fwd


if __name__ == "__main__":
    # Shapes consistent with the PyTorch spec: in_dim=512, out_dim=10, small batch.
    in_dim, out_dim = 512, 10
    batch = 8

    key = jax.random.PRNGKey(0)
    kx, kw, kb = jax.random.split(key, 3)

    x = jax.random.normal(kx, (batch, in_dim), dtype=jnp.float32)
    bound = 1.0 / (in_dim ** 0.5)  # PyTorch Linear-style init scale
    weight = jax.random.uniform(kw, (out_dim, in_dim), jnp.float32, -bound, bound)
    bias = jax.random.uniform(kb, (out_dim,), jnp.float32, -bound, bound)

    block = make_linear_relu(weight, bias)     # params prepared once; fwd is jitted
    y = jax.block_until_ready(block(x))
    assert y.shape == (batch, out_dim)
    assert y.dtype == jnp.float32

    # Reference consistent with the kernel's bf16 inputs / f32 accumulation / bf16 store.
    xc = x.astype(jnp.bfloat16).astype(jnp.float32)
    wc = weight.astype(jnp.bfloat16).astype(jnp.float32)
    y_ref = jnp.maximum(xc @ wc.T + bias, 0.0)
    assert jnp.allclose(y, y_ref, atol=2e-2, rtol=2e-2), "mismatch vs bf16 reference"

    # Loose sanity check vs the pure-f32 reference (bf16 quantization only).
    y_f32 = jnp.maximum(x @ weight.T + bias, 0.0)
    assert jnp.allclose(y, y_f32, atol=5e-2, rtol=5e-2), "mismatch vs f32 reference"

    print("KERNEL_OK")
</pallas_src>

<mosaic_0001>
module attributes {stable_mosaic.version = 11 : i64} {
  func.func @_linear_relu_kernel(%arg0: i32, %arg1: memref<8x512xbf16, #tpu.memory_space<vmem>>, %arg2: memref<512x128xbf16, #tpu.memory_space<vmem>>, %arg3: memref<1x128xf32, #tpu.memory_space<vmem>>, %arg4: memref<8x128xbf16, #tpu.memory_space<vmem>>) attributes {dimension_semantics = [#tpu.dimension_semantics<parallel>], iteration_bounds = array<i64: 1>, scalar_prefetch = 0 : i64, scratch_operands = 0 : i64, tpu.core_type = #tpu.core_type<tc>, window_params = [{transform_indices = @transform_0, window_bounds = array<i64: 8, 512>}, {pipeline_mode = #tpu.pipeline_mode<synchronous>, transform_indices = @transform_1, window_bounds = array<i64: 512, 128>}, {pipeline_mode = #tpu.pipeline_mode<synchronous>, transform_indices = @transform_2, window_bounds = array<i64: 1, 128>}, {transform_indices = @transform_3, window_bounds = array<i64: 8, 128>}]} {
    %c0 = arith.constant 0 : index
    %c0_0 = arith.constant 0 : index
    %0 = vector.load %arg1[%c0, %c0_0] : memref<8x512xbf16, #tpu.memory_space<vmem>>, vector<8x512xbf16>
    %c0_1 = arith.constant 0 : index
    %c0_2 = arith.constant 0 : index
    %1 = vector.load %arg2[%c0_1, %c0_2] : memref<512x128xbf16, #tpu.memory_space<vmem>>, vector<512x128xbf16>
    %cst = arith.constant dense<0.000000e+00> : vector<8x128xf32>
    %2 = tpu.matmul %0, %1, %cst {dimension_numbers = #tpu.dot_dimension_numbers<[1], [0], [0], [1], [0, 0, 1, 1], [], []>} : vector<8x512xbf16>, vector<512x128xbf16>, vector<8x128xf32> -> vector<8x128xf32>
    %c0_3 = arith.constant 0 : index
    %c0_4 = arith.constant 0 : index
    %3 = vector.load %arg3[%c0_3, %c0_4] : memref<1x128xf32, #tpu.memory_space<vmem>>, vector<1x128xf32>
    %4 = vector.broadcast %3 : vector<1x128xf32> to vector<8x128xf32>
    %5 = arith.addf %2, %4 : vector<8x128xf32>
    %cst_5 = arith.constant 0.000000e+00 : f32
    %6 = vector.broadcast %cst_5 : f32 to vector<8x128xf32>
    %7 = arith.maximumf %5, %6 : vector<8x128xf32>
    %8 = arith.truncf %7 : vector<8x128xf32> to vector<8x128xbf16>
    %c0_6 = arith.constant 0 : index
    %c0_7 = arith.constant 0 : index
    %9 = vector.load %arg4[%c0_6, %c0_7] : memref<8x128xbf16, #tpu.memory_space<vmem>>, vector<8x128xbf16>
    tpu.vector_store %arg4[%c0_6, %c0_7], %8 {strides = array<i32>} : memref<8x128xbf16, #tpu.memory_space<vmem>>, vector<8x128xbf16>,
    return
  }
  func.func @transform_0(%arg0: i32) -> (i32, i32) {
    %c0_i32 = arith.constant 0 : i32
    %c0_i32_0 = arith.constant 0 : i32
    return %arg0, %c0_i32 : i32, i32
  }
  func.func @transform_1(%arg0: i32) -> (i32, i32) {
    %c0_i32 = arith.constant 0 : i32
    %c0_i32_0 = arith.constant 0 : i32
    %c0_i32_1 = arith.constant 0 : i32
    return %c0_i32, %c0_i32_0 : i32, i32
  }
  func.func @transform_2(%arg0: i32) -> (i32, i32) {
    %c0_i32 = arith.constant 0 : i32
    %c0_i32_0 = arith.constant 0 : i32
    %c0_i32_1 = arith.constant 0 : i32
    return %c0_i32, %c0_i32_0 : i32, i32
  }
  func.func @transform_3(%arg0: i32) -> (i32, i32) {
    %c0_i32 = arith.constant 0 : i32
    %c0_i32_0 = arith.constant 0 : i32
    return %arg0, %c0_i32 : i32, i32
  }
}

</mosaic_0001>

<llo_original>
// kernel: fwd.1
$region0: #{fwd.1}
  #allocation0 [shape = 'u32[]', space=smem, size = 0x4, offset = 0x4, fixed_abs, tag = 'smem constant byte address 0x4 - core index']
  #allocation1 [shape = 'u32[144,128]{1,0:T(1,128)}', space=vmem, size = 0x12000, scoped, tag = 'internal scratch']
  %s0 = inlined_call_operand.vmem [shape: bf16[8,512], index: 0, kind: input, shape index: {}]
  %s1 = inlined_call_operand.hbm [shape: bf16[512,128], index: 1, kind: input, shape index: {}]
  %s2 = inlined_call_operand.vmem [shape: f32[1,128], index: 2, kind: input, shape index: {}]
  %s3 = inlined_call_operand.vmem [shape: bf16[8,128], index: 3, kind: output, shape index: {}]
  %s4 = sld [smem:[#allocation0]]
  $region26: #{fwd.1} parent=0
    _
  %s6 = ssub.s32 1, %s4
  %s7 = scalar_select 0, %s6, %s4
  $region1: #{fwd.1} parent=0
    #allocation2 [shape = 'u8[131072]{0}', space=vmem, size = 0x20000, scoped, tag = 'input window, operand 1, single buffered']
    #allocation3 [shape = 's32[1]{0}', space=sflag, size = 0x4, scoped, tag = 'scoped memory for fwd.1']
    %8 = vsyncpa [#allocation3], 0
    // Predicated region
    $region2: #{fwd.1} parent=1 // pred_check
      _
    $region3: #{fwd.1} parent=1 // pred_check_branch
      %10 = sbr.rel (0) target = $region5
    $region4: #{fwd.1} parent=1 // pred_region
      _
    $region5: #{fwd.1} parent=1 // pred_fallthru
      _
    // Predicated region
    $region6: #{fwd.1} parent=1 // pred_check
      _
    $region7: #{fwd.1} parent=1 // pred_check_branch
      %12 = sbr.rel (0) target = $region9
    $region8: #{fwd.1} parent=1 // pred_region
      %s14 = ssub.s32 4096, 4096
      %15 = vsyncadd [#allocation3], %s14
      %s16 = sshll.u32 [#allocation2], 4
      %s17 = int_to_ptr.vmem [resolvable:$true] %s16
      %22 = dma.hbm_to_vmem [thread:$0]  %s1, 4096, %s17, [#allocation3], 64, 64, 4
    $region9: #{fwd.1} parent=1 // pred_fallthru
      _
    // Predicated region
    $region10: #{fwd.1} parent=1 // pred_check
      _
    $region11: #{fwd.1} parent=1 // pred_check_branch
      %24 = sbr.rel (0) target = $region13
    $region12: #{fwd.1} parent=1 // pred_region
      _
    $region13: #{fwd.1} parent=1 // pred_fallthru
      _
    // Predicated region
    $region14: #{fwd.1} parent=1 // pred_check
      _
    $region15: #{fwd.1} parent=1 // pred_check_branch
      %26 = sbr.rel (0) target = $region17
    $region16: #{fwd.1} parent=1 // pred_region
      %27 = dma.done [#allocation3], 4096
    $region17: #{fwd.1} parent=1 // pred_fallthru
      _
    %v29 = vld [vmem:[%s0] sm:$0xff]
    %v30 = vld [vmem:[%s0 + $0x8] sm:$0xff]
    %v31 = vld [vmem:[#allocation2] sm:$0xf]
    %v32 = vld [vmem:[#allocation2 + $0x4] sm:$0xf]
    %v33 = vld [vmem:[#allocation2 + $0x8] sm:$0xf]
    %v34 = vld [vmem:[#allocation2 + $0xc] sm:$0xf]
    %v35 = vld [vmem:[#allocation2 + $0x10] sm:$0xf]
    %v36 = vld [vmem:[#allocation2 + $0x14] sm:$0xf]
    %v37 = vld [vmem:[#allocation2 + $0x18] sm:$0xf]
    %v38 = vld [vmem:[#allocation2 + $0x1c] sm:$0xf]
    %v39 = vld [vmem:[#allocation2 + $0x20] sm:$0xf]
    %v40 = vld [vmem:[#allocation2 + $0x24] sm:$0xf]
    %v41 = vld [vmem:[#allocation2 + $0x28] sm:$0xf]
    %v42 = vld [vmem:[#allocation2 + $0x2c] sm:$0xf]
    %v43 = vld [vmem:[#allocation2 + $0x30] sm:$0xf]
    %v44 = vld [vmem:[#allocation2 + $0x34] sm:$0xf]
    %v45 = vld [vmem:[#allocation2 + $0x38] sm:$0xf]
    %v46 = vld [vmem:[#allocation2 + $0x3c] sm:$0xf]
    %v47 = vld [vmem:[#allocation2 + $0x40] sm:$0xf]
    %v48 = vld [vmem:[#allocation2 + $0x44] sm:$0xf]
    %v49 = vld [vmem:[#allocation2 + $0x48] sm:$0xf]
    %v50 = vld [vmem:[#allocation2 + $0x4c] sm:$0xf]
    %v51 = vld [vmem:[#allocation2 + $0x50] sm:$0xf]
    %v52 = vld [vmem:[#allocation2 + $0x54] sm:$0xf]
    %v53 = vld [vmem:[#allocation2 + $0x58] sm:$0xf]
    %v54 = vld [vmem:[#allocation2 + $0x5c] sm:$0xf]
    %v55 = vld [vmem:[#allocation2 + $0x60] sm:$0xf]
    %v56 = vld [vmem:[#allocation2 + $0x64] sm:$0xf]
    %v57 = vld [vmem:[#allocation2 + $0x68] sm:$0xf]
    %v58 = vld [vmem:[#allocation2 + $0x6c] sm:$0xf]
    %v59 = vld [vmem:[#allocation2 + $0x70] sm:$0xf]
    %v60 = vld [vmem:[#allocation2 + $0x74] sm:$0xf]
    %v61 = vld [vmem:[#allocation2 + $0x78] sm:$0xf]
    %v62 = vld [vmem:[#allocation2 + $0x7c] sm:$0xf]
    %v63 = vld [vmem:[#allocation2 + $0x80] sm:$0xf]
    %v64 = vld [vmem:[#allocation2 + $0x84] sm:$0xf]
    %v65 = vld [vmem:[#allocation2 + $0x88] sm:$0xf]
    %v66 = vld [vmem:[#allocation2 + $0x8c] sm:$0xf]
    %v67 = vld [vmem:[#allocation2 + $0x90] sm:$0xf]
    %v68 = vld [vmem:[#allocation2 + $0x94] sm:$0xf]
    %v69 = vld [vmem:[#allocation2 + $0x98] sm:$0xf]
    %v70 = vld [vmem:[#allocation2 + $0x9c] sm:$0xf]
    %v71 = vld [vmem:[#allocation2 + $0xa0] sm:$0xf]
    %v72 = vld [vmem:[#allocation2 + $0xa4] sm:$0xf]
    %v73 = vld [vmem:[#allocation2 + $0xa8] sm:$0xf]
    %v74 = vld [vmem:[#allocation2 + $0xac] sm:$0xf]
    %v75 = vld [vmem:[#allocation2 + $0xb0] sm:$0xf]
    %v76 = vld [vmem:[#allocation2 + $0xb4] sm:$0xf]
    %v77 = vld [vmem:[#allocation2 + $0xb8] sm:$0xf]
    %v78 = vld [vmem:[#allocation2 + $0xbc] sm:$0xf]
    %v79 = vld [vmem:[#allocation2 + $0xc0] sm:$0xf]
    %v80 = vld [vmem:[#allocation2 + $0xc4] sm:$0xf]
    %v81 = vld [vmem:[#allocation2 + $0xc8] sm:$0xf]
    %v82 = vld [vmem:[#allocation2 + $0xcc] sm:$0xf]
    %v83 = vld [vmem:[#allocation2 + $0xd0] sm:$0xf]
    %v84 = vld [vmem:[#allocation2 + $0xd4] sm:$0xf]
    %v85 = vld [vmem:[#allocation2 + $0xd8] sm:$0xf]
    %v86 = vld [vmem:[#allocation2 + $0xdc] sm:$0xf]
    %v87 = vld [vmem:[#allocation2 + $0xe0] sm:$0xf]
    %v88 = vld [vmem:[#allocation2 + $0xe4] sm:$0xf]
    %v89 = vld [vmem:[#allocation2 + $0xe8] sm:$0xf]
    %v90 = vld [vmem:[#allocation2 + $0xec] sm:$0xf]
    %v91 = vld [vmem:[#allocation2 + $0xf0] sm:$0xf]
    %v92 = vld [vmem:[#allocation2 + $0xf4] sm:$0xf]
    %v93 = vld [vmem:[#allocation2 + $0xf8] sm:$0xf]
    %v94 = vld [vmem:[#allocation2 + $0xfc] sm:$0xf]
    %v95 = vld [vmem:[%s2] sm:$0x1]
    %v97 = vlaneseq
    %v98 = vshrl.u32 %v97, 7
    %v99 = vsub.s32 0, %v98
    %v100 = vrot.slane %v95, %v99
    %v104 = vunpack.c.l.b16 %v29
    %v105 = vunpack.c.h.b16 %v29
    %v106 = vunpack.c.l.b16 %v30
    %v107 = vunpack.c.h.b16 %v30
    %v108 = vpack.c.b16 %v104, %v104
    %v109 = vpack.c.b16 %v105, %v105
    %v110 = vpack.c.b16 %v106, %v106
    %v111 = vpack.c.b16 %v107, %v107
    %v180 = vunpack.c.l.b16 %v31
    %v181 = vunpack.c.l.b16 %v32
    %v182 = vunpack.c.l.b16 %v33
    %v183 = vunpack.c.l.b16 %v34
    %v184 = vunpack.c.l.b16 %v35
    %v185 = vunpack.c.l.b16 %v36
    %v186 = vunpack.c.l.b16 %v37
    %v187 = vunpack.c.l.b16 %v38
    %v188 = vunpack.c.l.b16 %v39
    %v189 = vunpack.c.l.b16 %v40
    %v190 = vunpack.c.l.b16 %v41
    %v191 = vunpack.c.l.b16 %v42
    %v192 = vunpack.c.l.b16 %v43
    %v193 = vunpack.c.l.b16 %v44
    %v194 = vunpack.c.l.b16 %v45
    %v195 = vunpack.c.l.b16 %v46
    %v196 = vunpack.c.l.b16 %v47
    %v197 = vunpack.c.l.b16 %v48
    %v198 = vunpack.c.l.b16 %v49
    %v199 = vunpack.c.l.b16 %v50
    %v200 = vunpack.c.l.b16 %v51
    %v201 = vunpack.c.l.b16 %v52
    %v202 = vunpack.c.l.b16 %v53
    %v203 = vunpack.c.l.b16 %v54
    %v204 = vunpack.c.l.b16 %v55
    %v205 = vunpack.c.l.b16 %v56
    %v206 = vunpack.c.l.b16 %v57
    %v207 = vunpack.c.l.b16 %v58
    %v208 = vunpack.c.l.b16 %v59
    %v209 = vunpack.c.l.b16 %v60
    %v210 = vunpack.c.l.b16 %v61
    %v211 = vunpack.c.l.b16 %v62
    %v212 = vunpack.c.l.b16 %v63
    %v213 = vunpack.c.l.b16 %v64
    %v214 = vunpack.c.l.b16 %v65
    %v215 = vunpack.c.l.b16 %v66
    %v216 = vunpack.c.l.b16 %v67
    %v217 = vunpack.c.l.b16 %v68
    %v218 = vunpack.c.l.b16 %v69
    %v219 = vunpack.c.l.b16 %v70
    %v220 = vunpack.c.l.b16 %v71
    %v221 = vunpack.c.l.b16 %v72
    %v222 = vunpack.c.l.b16 %v73
    %v223 = vunpack.c.l.b16 %v74
    %v224 = vunpack.c.l.b16 %v75
    %v225 = vunpack.c.l.b16 %v76
    %v226 = vunpack.c.l.b16 %v77
    %v227 = vunpack.c.l.b16 %v78
    %v228 = vunpack.c.l.b16 %v79
    %v229 = vunpack.c.l.b16 %v80
    %v230 = vunpack.c.l.b16 %v81
    %v231 = vunpack.c.l.b16 %v82
    %v232 = vunpack.c.l.b16 %v83
    %v233 = vunpack.c.l.b16 %v84
    %v234 = vunpack.c.l.b16 %v85
    %v235 = vunpack.c.l.b16 %v86
    %v236 = vunpack.c.l.b16 %v87
    %v237 = vunpack.c.l.b16 %v88
    %v238 = vunpack.c.l.b16 %v89
    %v239 = vunpack.c.l.b16 %v90
    %v240 = vunpack.c.l.b16 %v91
    %v241 = vunpack.c.l.b16 %v92
    %v242 = vunpack.c.l.b16 %v93
    %v243 = vunpack.c.l.b16 %v94
    %v244 = vpack.c.b16 %v181, %v180
    %v245 = vpack.c.b16 %v183, %v182
    %v246 = vpack.c.b16 %v185, %v184
    %v247 = vpack.c.b16 %v187, %v186
    %v248 = vpack.c.b16 %v189, %v188
    %v249 = vpack.c.b16 %v191, %v190
    %v250 = vpack.c.b16 %v193, %v192
    %v251 = vpack.c.b16 %v195, %v194
    %v252 = vpack.c.b16 %v197, %v196
    %v253 = vpack.c.b16 %v199, %v198
    %v254 = vpack.c.b16 %v201, %v200
    %v255 = vpack.c.b16 %v203, %v202
    %v256 = vpack.c.b16 %v205, %v204
    %v257 = vpack.c.b16 %v207, %v206
    %v258 = vpack.c.b16 %v209, %v208
    %v259 = vpack.c.b16 %v211, %v210
    %v260 = vpack.c.b16 %v213, %v212
    %v261 = vpack.c.b16 %v215, %v214
    %v262 = vpack.c.b16 %v217, %v216
    %v263 = vpack.c.b16 %v219, %v218
    %v264 = vpack.c.b16 %v221, %v220
    %v265 = vpack.c.b16 %v223, %v222
    %v266 = vpack.c.b16 %v225, %v224
    %v267 = vpack.c.b16 %v227, %v226
    %v268 = vpack.c.b16 %v229, %v228
    %v269 = vpack.c.b16 %v231, %v230
    %v270 = vpack.c.b16 %v233, %v232
    %v271 = vpack.c.b16 %v235, %v234
    %v272 = vpack.c.b16 %v237, %v236
    %v273 = vpack.c.b16 %v239, %v238
    %v274 = vpack.c.b16 %v241, %v240
    %v275 = vpack.c.b16 %v243, %v242
    %308 = vmatprep.subr.bf16.mxu0 0
    %309 = vmatpush1.bf16.msra.mxu0 %v251
    %310 = vmatprep.subr.bf16.mxu0 0
    %311 = vmatpush1.bf16.msra.mxu0 %v250
    %312 = vmatprep.subr.bf16.mxu0 0
    %313 = vmatpush1.bf16.msra.mxu0 %v249
    %314 = vmatprep.subr.bf16.mxu0 0
    %315 = vmatpush1.bf16.msra.mxu0 %v248
    %316 = vmatprep.subr.bf16.mxu0 0
    %317 = vmatpush1.bf16.msra.mxu0 %v247
    %318 = vmatprep.subr.bf16.mxu0 0
    %319 = vmatpush1.bf16.msra.mxu0 %v246
    %320 = vmatprep.subr.bf16.mxu0 0
    %321 = vmatpush1.bf16.msra.mxu0 %v245
    %322 = vmatprep.subr.bf16.mxu0 0
    %323 = vmatpush1.bf16.msra.mxu0 %v244
    %324 = vmatprep.subr.bf16.mxu0 0
    %325 = vmatpush2.bf16.msra.mxu0 %v259
    %326 = vmatprep.subr.bf16.mxu0 0
    %327 = vmatpush2.bf16.msra.mxu0 %v258
    %328 = vmatprep.subr.bf16.mxu0 0
    %329 = vmatpush2.bf16.msra.mxu0 %v257
    %330 = vmatprep.subr.bf16.mxu0 0
    %331 = vmatpush2.bf16.msra.mxu0 %v256
    %332 = vmatprep.subr.bf16.mxu0 0
    %333 = vmatpush2.bf16.msra.mxu0 %v255
    %334 = vmatprep.subr.bf16.mxu0 0
    %335 = vmatpush2.bf16.msra.mxu0 %v254
    %336 = vmatprep.subr.bf16.mxu0 0
    %337 = vmatpush2.bf16.msra.mxu0 %v253
    %338 = vmatprep.subr.bf16.mxu0 0
    %339 = vmatpush2.bf16.msra.mxu0 %v252
    %340 = vmatprep.mubr.bf16.mxu0 %v109
    %341 = vmatmul.mubr.bf16.gmra.mxu0 %v108
    %v342 = vpop.f32.mrf.mxu0
    %v343 = vadd.f32 %v100, %v342
    %v344 = vpop.f32.mrf.mxu0
    %v345 = vpop.f32.mrf.mxu0
    %v346 = vpop.f32.mrf.mxu0
    %347 = vdwg.mxu0
    %348 = vmatprep.subr.bf16.mxu0 0
    %349 = vmatpush1.bf16.msra.mxu0 %v267
    %350 = vmatprep.subr.bf16.mxu0 0
    %351 = vmatpush1.bf16.msra.mxu0 %v266
    %352 = vmatprep.subr.bf16.mxu0 0
    %353 = vmatpush1.bf16.msra.mxu0 %v265
    %354 = vmatprep.subr.bf16.mxu0 0
    %355 = vmatpush1.bf16.msra.mxu0 %v264
    %356 = vmatprep.subr.bf16.mxu0 0
    %357 = vmatpush1.bf16.msra.mxu0 %v263
    %358 = vmatprep.subr.bf16.mxu0 0
    %359 = vmatpush1.bf16.msra.mxu0 %v262
    %360 = vmatprep.subr.bf16.mxu0 0
    %361 = vmatpush1.bf16.msra.mxu0 %v261
    %362 = vmatprep.subr.bf16.mxu0 0
    %363 = vmatpush1.bf16.msra.mxu0 %v260
    %364 = vmatprep.subr.bf16.mxu0 0
    %365 = vmatpush2.bf16.msra.mxu0 %v275
    %366 = vmatprep.subr.bf16.mxu0 0
    %367 = vmatpush2.bf16.msra.mxu0 %v274
    %368 = vmatprep.subr.bf16.mxu0 0
    %369 = vmatpush2.bf16.msra.mxu0 %v273
    %370 = vmatprep.subr.bf16.mxu0 0
    %371 = vmatpush2.bf16.msra.mxu0 %v272
    %372 = vmatprep.subr.bf16.mxu0 0
    %373 = vmatpush2.bf16.msra.mxu0 %v271
    %374 = vmatprep.subr.bf16.mxu0 0
    %375 = vmatpush2.bf16.msra.mxu0 %v270
    %376 = vmatprep.subr.bf16.mxu0 0
    %377 = vmatpush2.bf16.msra.mxu0 %v269
    %378 = vmatprep.subr.bf16.mxu0 0
    %379 = vmatpush2.bf16.msra.mxu0 %v268
    %380 = vmatprep.mubr.bf16.mxu0 %v111
    %381 = vmatmul.mubr.bf16.gmra.mxu0 %v110
    %v382 = vpop.f32.mrf.mxu0
    %v383 = vadd.f32 %v343, %v382
    %v384 = vpop.f32.mrf.mxu0
    %v385 = vpop.f32.mrf.mxu0
    %v386 = vpop.f32.mrf.mxu0
    %387 = vdwg.mxu0
    %v388 = vmax.f32 %v383, 0.0
    %v389 = vpack.c.bf16 %v388, %v388
    %390 = vst [vmem:[%s3] sm:$0xf] %v389
    // Predicated region
    $region18: #{fwd.1} parent=1 // pred_check
      _
    $region19: #{fwd.1} parent=1 // pred_check_branch
      %392 = sbr.rel (0) target = $region21
    $region20: #{fwd.1} parent=1 // pred_region
      _
    $region21: #{fwd.1} parent=1 // pred_fallthru
      _
    // Predicated region
    $region22: #{fwd.1} parent=1 // pred_check
      _
    $region23: #{fwd.1} parent=1 // pred_check_branch
      %394 = sbr.rel (0) target = $region25
    $region24: #{fwd.1} parent=1 // pred_region
      _
    $region25: #{fwd.1} parent=1 // pred_fallthru
      _
    %395 = vsyncpa [#allocation3], 1

</llo_original>
